<compile_context>
chip_gen: v5e
topology: v5e:2x2
jax: 0.10.0
libtpu: 0.0.40
codegen_flags: <defaults>
</compile_context>

<pallas_src>
import functools

import jax
import jax.numpy as jnp
from jax.experimental import pallas as pl
from jax.experimental.pallas import tpu as pltpu

_LANE = 128
_SUBLANE = 8


def _round_up(n, m):
    return ((n + m - 1) // m) * m


def affine_kernel(x_ref, wc_ref, bc_ref, o_ref, *, small_k):
    """One fused affine map: o = x @ Wc + bc (fc2(fc1(x)) collapsed)."""
    x = x_ref[...]
    wc = wc_ref[...]

    if small_k:
        # n_features is tiny: a handful of VPU broadcast multiply-adds beat an
        # MXU pass that would use <1% of the systolic array. f32 accumulate.
        f = x.shape[1]
        y = x[:, 0:1].astype(jnp.float32) * wc[0:1, :].astype(jnp.float32)
        for k in range(1, f):
            y = y + x[:, k:k + 1].astype(jnp.float32) * wc[k:k + 1, :].astype(jnp.float32)
    else:
        y = jnp.dot(x, wc, preferred_element_type=jnp.float32)

    y = y + bc_ref[...]                      # bc is [1, O], broadcasts over batch
    o_ref[...] = y.astype(o_ref.dtype)


def prepare_params(w1, b1, w2, b2, compute_dtype=jnp.float32):
    """One-time parameter prep (hoisted out of the per-call hot path).

    Collapses fc1/fc2 (no activation in between) into a single affine map:
        Wc = W1^T @ W2^T   -> [n_features, n_output]
        bc = b1 @ W2^T + b2 -> [1, n_output]
    The collapse is done in f32; only Wc is cast to `compute_dtype`
    (use jnp.bfloat16 on v6e/v7x when tolerance allows — halves x/Wc DMA).
    """
    h_dim, f_dim = w1.shape           # PyTorch nn.Linear layout: [out, in]
    o_dim, h_dim2 = w2.shape
    assert h_dim2 == h_dim, "fc1/fc2 shape mismatch"

    w1f = w1.astype(jnp.float32)
    w2f = w2.astype(jnp.float32)
    wc = jnp.transpose(w1f) @ jnp.transpose(w2f)                       # [F, O]
    bc = (b1.astype(jnp.float32) @ jnp.transpose(w2f)
          + b2.astype(jnp.float32)).reshape(1, o_dim)                  # [1, O]

    return dict(wc=wc.astype(compute_dtype), bc=bc,
                n_output=o_dim, compute_dtype=compute_dtype)


def cnn_forward(x, params, *, batch_tile=512):
    """Forward pass of CNN: fc2(fc1(x)), computed as the collapsed x @ Wc + bc."""
    b_dim, f_dim = x.shape
    wc = params["wc"]
    bc = params["bc"]
    o_dim = wc.shape[1]
    compute_dtype = params["compute_dtype"]

    # Avoid an extra XLA op when no cast is needed (default f32 path).
    x_in = x if x.dtype == compute_dtype else x.astype(compute_dtype)

    # Batch tiling:
    #  - B <= 8: one full-array block (always layout-legal).
    #  - B  > 8: at least 2 grid steps (v7x: 2 TensorCores, "parallel" axis),
    #            capped at `batch_tile` (default 512) rows per step to
    #            amortize the ~0.35us per-step overhead for large B.
    if b_dim <= _SUBLANE:
        tb = b_dim
    else:
        tb = min(batch_tile, _round_up(pl.cdiv(b_dim, 2), _SUBLANE))
    grid = (pl.cdiv(b_dim, tb),)

    small_k = f_dim <= _SUBLANE

    # Cost estimate from LOGICAL dims (no padded dims exist anymore).
    flops = 2 * b_dim * f_dim * o_dim + b_dim * o_dim
    bytes_accessed = (
        x_in.size * x_in.dtype.itemsize
        + wc.size * wc.dtype.itemsize
        + bc.size * bc.dtype.itemsize
        + b_dim * o_dim * x.dtype.itemsize)

    out = pl.pallas_call(
        functools.partial(affine_kernel, small_k=small_k),
        out_shape=jax.ShapeDtypeStruct((b_dim, o_dim), x.dtype),
        grid_spec=pl.GridSpec(
            grid=grid,
            in_specs=[
                pl.BlockSpec((tb, f_dim), lambda i: (i, 0)),     # x batch tile
                pl.BlockSpec((f_dim, o_dim), lambda i: (0, 0)),  # Wc (tiny, resident)
                pl.BlockSpec((1, o_dim), lambda i: (0, 0)),      # bc
            ],
            out_specs=pl.BlockSpec((tb, o_dim), lambda i: (i, 0)),
        ),
        compiler_params=pltpu.CompilerParams(
            dimension_semantics=("parallel",)),
        cost_estimate=pl.CostEstimate(
            flops=flops, transcendentals=0, bytes_accessed=bytes_accessed),
    )(x_in, wc, bc)

    # out is exactly (B, n_output): ragged last block handled by Pallas
    # writeback masking — no post-pad slicing needed.
    return out


if __name__ == "__main__":
    # Small shapes consistent with the original module's use
    # (binary-function linear fit: 2 inputs, hidden layer, scalar output).
    B = 8
    n_features = 2
    n_hidden = 32
    n_output = 1

    key = jax.random.PRNGKey(0)
    kx, k1, k2, k3, k4 = jax.random.split(key, 5)

    x = jax.random.normal(kx, (B, n_features), dtype=jnp.float32)
    # PyTorch nn.Linear weight layout: [out, in].
    w1 = jax.random.normal(k1, (n_hidden, n_features), dtype=jnp.float32) * 0.1
    b1 = jax.random.normal(k2, (n_hidden,), dtype=jnp.float32) * 0.1
    w2 = jax.random.normal(k3, (n_output, n_hidden), dtype=jnp.float32) * 0.1
    b2 = jax.random.normal(k4, (n_output,), dtype=jnp.float32) * 0.1

    # One-time collapse of fc1/fc2 (outside the per-call path).
    # Pass compute_dtype=jnp.bfloat16 on v6e/v7x when precision allows.
    params = prepare_params(w1, b1, w2, b2, compute_dtype=jnp.float32)

    out = cnn_forward(x, params)
    jax.block_until_ready(out)

    # Reference check (plain JAX, same math as the PyTorch forward).
    ref = (x @ w1.T + b1) @ w2.T + b2
    assert out.shape == (B, n_output)
    assert jnp.allclose(out, ref, atol=1e-5, rtol=1e-5)

    print("KERNEL_OK")
</pallas_src>

<mosaic_0001>
module attributes {stable_mosaic.version = 11 : i64} {
  func.func @affine_kernel(%arg0: i32, %arg1: memref<8x2xf32, #tpu.memory_space<vmem>>, %arg2: memref<2x1xf32, #tpu.memory_space<vmem>>, %arg3: memref<1x1xf32, #tpu.memory_space<vmem>>, %arg4: memref<8x1xf32, #tpu.memory_space<vmem>>) attributes {dimension_semantics = [#tpu.dimension_semantics<parallel>], iteration_bounds = array<i64: 1>, scalar_prefetch = 0 : i64, scratch_operands = 0 : i64, tpu.core_type = #tpu.core_type<tc>, window_params = [{transform_indices = @transform_0, window_bounds = array<i64: 8, 2>}, {pipeline_mode = #tpu.pipeline_mode<synchronous>, transform_indices = @transform_1, window_bounds = array<i64: 2, 1>}, {pipeline_mode = #tpu.pipeline_mode<synchronous>, transform_indices = @transform_2, window_bounds = array<i64: 1, 1>}, {transform_indices = @transform_3, window_bounds = array<i64: 8, 1>}]} {
    %c0 = arith.constant 0 : index
    %c0_0 = arith.constant 0 : index
    %0 = vector.load %arg1[%c0, %c0_0] : memref<8x2xf32, #tpu.memory_space<vmem>>, vector<8x2xf32>
    %c0_1 = arith.constant 0 : index
    %c0_2 = arith.constant 0 : index
    %1 = vector.load %arg2[%c0_1, %c0_2] : memref<2x1xf32, #tpu.memory_space<vmem>>, vector<2x1xf32>
    %2 = vector.extract_strided_slice %0 {offsets = [0, 0], sizes = [8, 1], strides = [1, 1]} : vector<8x2xf32> to vector<8x1xf32>
    %3 = vector.extract_strided_slice %1 {offsets = [0, 0], sizes = [1, 1], strides = [1, 1]} : vector<2x1xf32> to vector<1x1xf32>
    %4 = vector.broadcast %3 : vector<1x1xf32> to vector<8x1xf32>
    %5 = arith.mulf %2, %4 : vector<8x1xf32>
    %6 = vector.extract_strided_slice %0 {offsets = [0, 1], sizes = [8, 1], strides = [1, 1]} : vector<8x2xf32> to vector<8x1xf32>
    %7 = vector.extract_strided_slice %1 {offsets = [1, 0], sizes = [1, 1], strides = [1, 1]} : vector<2x1xf32> to vector<1x1xf32>
    %8 = vector.broadcast %7 : vector<1x1xf32> to vector<8x1xf32>
    %9 = arith.mulf %6, %8 : vector<8x1xf32>
    %10 = arith.addf %5, %9 : vector<8x1xf32>
    %c0_3 = arith.constant 0 : index
    %c0_4 = arith.constant 0 : index
    %11 = vector.load %arg3[%c0_3, %c0_4] : memref<1x1xf32, #tpu.memory_space<vmem>>, vector<1x1xf32>
    %12 = vector.broadcast %11 : vector<1x1xf32> to vector<8x1xf32>
    %13 = arith.addf %10, %12 : vector<8x1xf32>
    %c0_5 = arith.constant 0 : index
    %c0_6 = arith.constant 0 : index
    %14 = vector.load %arg4[%c0_5, %c0_6] : memref<8x1xf32, #tpu.memory_space<vmem>>, vector<8x1xf32>
    tpu.vector_store %arg4[%c0_5, %c0_6], %13 {strides = array<i32>} : memref<8x1xf32, #tpu.memory_space<vmem>>, vector<8x1xf32>,
    return
  }
  func.func @transform_0(%arg0: i32) -> (i32, i32) {
    %c0_i32 = arith.constant 0 : i32
    %c0_i32_0 = arith.constant 0 : i32
    return %arg0, %c0_i32 : i32, i32
  }
  func.func @transform_1(%arg0: i32) -> (i32, i32) {
    %c0_i32 = arith.constant 0 : i32
    %c0_i32_0 = arith.constant 0 : i32
    %c0_i32_1 = arith.constant 0 : i32
    return %c0_i32, %c0_i32_0 : i32, i32
  }
  func.func @transform_2(%arg0: i32) -> (i32, i32) {
    %c0_i32 = arith.constant 0 : i32
    %c0_i32_0 = arith.constant 0 : i32
    %c0_i32_1 = arith.constant 0 : i32
    return %c0_i32, %c0_i32_0 : i32, i32
  }
  func.func @transform_3(%arg0: i32) -> (i32, i32) {
    %c0_i32 = arith.constant 0 : i32
    %c0_i32_0 = arith.constant 0 : i32
    return %arg0, %c0_i32 : i32, i32
  }
}

</mosaic_0001>

<llo_original>
// kernel: tpu_custom_call.1
$region0: #{tpu_custom_call.1}
  #allocation0 [shape = 'u32[]', space=smem, size = 0x4, offset = 0x4, fixed_abs, tag = 'smem constant byte address 0x4 - core index']
  #allocation1 [shape = 'u32[72,128]{1,0:T(1,128)}', space=vmem, size = 0x9000, scoped, tag = 'internal scratch']
  #allocation2 [shape = 'f32[1,1]{1,0:T(1,128)S(1)}', space=vmem, size = 0x200, scoped, tag = 'scoped memory for tpu_custom_call.1']
  %s0 = inlined_call_operand.vmem [shape: f32[8,2], index: 0, kind: input, shape index: {}]
  %s1 = inlined_call_operand.vmem [shape: f32[2,1], index: 1, kind: input, shape index: {}]
  %s2 = inlined_call_operand.<no memory space> [shape: f32[1,1], index: 2, kind: input, shape index: {}]
  %s3 = inlined_call_operand.vmem [shape: f32[8,1], index: 3, kind: output, shape index: {}]
  %s4 = sld [smem:[#allocation0]]
  $region22: #{tpu_custom_call.1} parent=0
    _
  %s6 = ssub.s32 1, %s4
  %s7 = scalar_select 0, %s6, %s4
  %v8 = vstv %s2
  %9 = vst [vmem:[#allocation2] sm:$0x1] %v8
  // Predicated region
  $region2: #{tpu_custom_call.1} parent=0 // pred_check
    _
  $region3: #{tpu_custom_call.1} parent=0 // pred_check_branch
    %11 = sbr.rel (0) target = $region5
  $region4: #{tpu_custom_call.1} parent=0 // pred_region
    _
  $region5: #{tpu_custom_call.1} parent=0 // pred_fallthru
    _
  // Predicated region
  $region6: #{tpu_custom_call.1} parent=0 // pred_check
    _
  $region7: #{tpu_custom_call.1} parent=0 // pred_check_branch
    %13 = sbr.rel (0) target = $region9
  $region8: #{tpu_custom_call.1} parent=0 // pred_region
    _
  $region9: #{tpu_custom_call.1} parent=0 // pred_fallthru
    _
  // Predicated region
  $region10: #{tpu_custom_call.1} parent=0 // pred_check
    _
  $region11: #{tpu_custom_call.1} parent=0 // pred_check_branch
    %15 = sbr.rel (0) target = $region13
  $region12: #{tpu_custom_call.1} parent=0 // pred_region
    _
  $region13: #{tpu_custom_call.1} parent=0 // pred_fallthru
    _
  %v16 = vld [vmem:[%s0] sm:$0xff]
  %v17 = vld [vmem:[%s1] sm:$0x3]
  %v18 = vperm.slane %v17, 0
  %v19 = vmul.f32 %v16, %v18
  %v20 = vperm.slane %v17, 1
  %22 = vrot.lane.b32.xlu0 %v20, 1
  %v23 = vpop.permute.xlu0 %22
  %v25 = vmul.f32 %v16, %v23
  %27 = vrot.lane.b32.xlu0 %v25, 127
  %v28 = vpop.permute.xlu0 %27
  %v30 = vadd.f32 %v19, %v28
  %v31 = vld [vmem:[#allocation2] sm:$0x1]
  %v33 = vperm.slane %v31, 0
  %v35 = vadd.f32 %v30, %v33
  %vm36 = vcmask 7168
  %37 = vst.msk [vmem:[%s3] sm:$0xff] %vm36, %v35
  // Predicated region
  $region14: #{tpu_custom_call.1} parent=0 // pred_check
    _
  $region15: #{tpu_custom_call.1} parent=0 // pred_check_branch
    %39 = sbr.rel (0) target = $region17
  $region16: #{tpu_custom_call.1} parent=0 // pred_region
    _
  $region17: #{tpu_custom_call.1} parent=0 // pred_fallthru
    _
  // Predicated region
  $region18: #{tpu_custom_call.1} parent=0 // pred_check
    _
  $region19: #{tpu_custom_call.1} parent=0 // pred_check_branch
    %41 = sbr.rel (0) target = $region21
  $region20: #{tpu_custom_call.1} parent=0 // pred_region
    _
  $region21: #{tpu_custom_call.1} parent=0 // pred_fallthru
    _

</llo_original>
